<compile_context>
chip_gen: v7x
topology: tpu7x:2x2x1
jax: 0.10.0
libtpu: 0.0.40
codegen_flags: <defaults>
</compile_context>

<pallas_src>
import jax
import jax.numpy as jnp
from jax.experimental import pallas as pl
from jax.experimental.pallas import tpu as pltpu


# ----------------------------------------------------------------------------
# Fixed-weight construction (plain JAX glue, mirrors GConv.__init__)
# ----------------------------------------------------------------------------

def _hermite(n, z):
    """Physicists' Hermite polynomial H_n(z) via recurrence."""
    if n == 0:
        return jnp.ones_like(z)
    if n == 1:
        return 2.0 * z
    h_prev, h_cur = jnp.ones_like(z), 2.0 * z
    for k in range(1, n):
        h_prev, h_cur = h_cur, 2.0 * z * h_cur - 2.0 * k * h_prev
    return h_cur


def gaussian_basis_2d(x, y, sigma, max_ord):
    # TODO(synk): GaussianBasis2d source not provided; using the standard
    # Hermite-Gaussian (Gaussian-derivative) basis ordered by total order.
    g = jnp.exp(-(x ** 2 + y ** 2) / (2.0 * sigma ** 2))
    feats = []
    for order in range(max_ord + 1):
        for i in range(order, -1, -1):
            j = order - i
            feats.append(_hermite(i, x / sigma) * _hermite(j, y / sigma) * g)
    return jnp.stack(feats, axis=0)  # (F, N, K)


def compute_support(l1, l2, k):
    """Mirror of GConv.compute_support (KDTree replaced by brute-force top_k)."""
    d2 = jnp.sum((l2[:, None, :] - l1[None, :, :]) ** 2, axis=-1)   # (N, M)
    dists = jnp.sqrt(d2)
    neg_topk, idx = jax.lax.top_k(-dists, k)                        # ascending dists
    dists_k = -neg_topk                                             # (N, k)
    patches = l1[idx] - l2[:, None, :]                              # (N, k, 2)
    mean_dists = jnp.mean(dists_k[:, 1:7], axis=-1)
    mean_dists = jnp.maximum(mean_dists, 1e-6)
    patches = patches / mean_dists[:, None, None]
    return patches, idx


def compute_filter_weights(patch_coords, sigma, max_ord):
    """Mirror of GConv.compute_filter_weights (normalization over the k axis)."""
    x, y = patch_coords[..., 0], patch_coords[..., 1]               # (N, K)
    weights = gaussian_basis_2d(x, y, sigma, max_ord)               # (F, N, K)
    w0, wr = weights[0], weights[1:]
    wr = wr - jnp.mean(wr, axis=-1, keepdims=True)
    norm = jnp.maximum(jnp.sqrt(jnp.sum(wr ** 2, axis=-1, keepdims=True)), 1e-6)
    wr = wr / norm
    sum_w = jnp.maximum(jnp.sum(w0, axis=-1, keepdims=True), 1e-6)
    w0 = w0 / sum_w
    return jnp.concatenate([w0[None], wr], axis=0).astype(jnp.float32)  # (F, N, K)


# ----------------------------------------------------------------------------
# Fused Pallas kernel: gathered Gaussian filter bank + 1x1 conv + bias
# ----------------------------------------------------------------------------

def _fused_conv_kernel(x_ref, w_ref, wc_ref, b_ref, o_ref):
    # x_ref : (Cp, Mp)        bf16   one batch's (zero-padded) input rows
    # w_ref : (F, Mp, TILE_N) bf16   dense gathered filter bank, one N tile
    # wc_ref: (F, O, Cp)      bf16   permuted 1x1-conv weight
    # b_ref : (O, 1)          f32    bias
    # o_ref : (O, TILE_N)     f32    output block (batch b, N tile j)
    n_filters = w_ref.shape[0]
    x = x_ref[...]
    acc = jnp.zeros(o_ref.shape, jnp.float32)
    for f in range(n_filters):                 # F is small (e.g. 6): unrolled
        y_f = jnp.dot(x, w_ref[f], preferred_element_type=jnp.float32)   # (Cp, TN)
        acc = acc + jnp.dot(wc_ref[f], y_f.astype(jnp.bfloat16),
                            preferred_element_type=jnp.float32)          # (O, TN)
    o_ref[...] = (acc + b_ref[...]).astype(o_ref.dtype)


def _round_up(x, m):
    return ((x + m - 1) // m) * m


def _device_vmem_bytes():
    try:
        return int(pltpu.get_tpu_info().vmem_capacity_bytes)
    except Exception:
        return 64 << 20          # conservative fallback (v7x per-core VMEM)


def _pick_tile_n(n_pad, n_filters, m_pad, c_pad, o, budget):
    """Largest multiple-of-128 divisor of n_pad whose working set fits `budget`.

    Working set counts the DEFAULT double buffers for every pipelined block.
    """
    best, t = 128, 128
    while t <= n_pad:
        if n_pad % t == 0:
            need = (2 * c_pad * m_pad * 2                 # x block (bf16) x2 bufs
                    + 2 * n_filters * m_pad * t * 2       # weight block (bf16) x2
                    + 2 * o * t * 4                       # out block (f32) x2
                    + 2 * n_filters * o * c_pad * 2       # wc (bf16) x2
                    + 2 * o * 4)                          # bias x2
            if need <= budget:
                best = t
        t += 128
    return best


@jax.jit
def conv_forward(x, filter_weights, idx, conv_w, conv_b):
    """x: (B, C, M) f32; filter_weights: (F, N, K); idx: (N, K) int;
    conv_w: (O, F*C); conv_b: (O,)  ->  (B, O, N) f32."""
    B, C, M = x.shape
    F_, N, K = filter_weights.shape
    O = conv_w.shape[0]

    # -------- one-time prep of the fixed operators (plain JAX, tiny) --------
    # Dense gathered filter bank via scatter-add (no (N, K, M) one-hot):
    #   Wd[f, n, m] = sum_k filter_weights[f, n, k] * [idx[n, k] == m]
    rows = jnp.arange(N)[:, None]
    w_dense = jnp.zeros((F_, N, M), jnp.float32).at[:, rows, idx].add(filter_weights)
    wg = jnp.transpose(w_dense, (0, 2, 1))                           # (F, M, N)

    # Pad contraction dim M and lane dim N to multiples of 128, channel dim C to
    # a multiple of 8 (zero padding is numerically exact); cast MXU operands bf16.
    Mp = _round_up(max(M, 128), 128)
    Np = _round_up(max(N, 128), 128)
    Cp = _round_up(C, 8)
    wg = jnp.pad(wg, ((0, 0), (0, Mp - M), (0, Np - N))).astype(jnp.bfloat16)
    xp = jnp.pad(x, ((0, 0), (0, Cp - C), (0, Mp - M))).astype(jnp.bfloat16)

    # Permute the 1x1-conv weight to (f, o, c) so it contracts directly with the
    # per-filter intermediate:  wc3[f, o, c] = conv_w[o, f*C + c]
    wc3 = conv_w.reshape(O, F_, C).transpose(1, 0, 2)                # (F, O, C)
    wc3 = jnp.pad(wc3, ((0, 0), (0, 0), (0, Cp - C))).astype(jnp.bfloat16)
    bias2d = conv_b.reshape(O, 1).astype(jnp.float32)

    # -------- device-aware tile / VMEM budgeting --------
    dev_vmem = _device_vmem_bytes()
    tile_n = _pick_tile_n(Np, F_, Mp, Cp, O, budget=int(0.55 * dev_vmem))
    n_tiles = Np // tile_n
    needed = (2 * Cp * Mp * 2 + 2 * F_ * Mp * tile_n * 2 + 2 * O * tile_n * 4
              + 2 * F_ * O * Cp * 2 + 2 * O * 4)
    vmem_bytes = int(min(max(needed + (4 << 20), 16 << 20), int(0.75 * dev_vmem)))

    flops = 2 * B * F_ * Np * (Cp * Mp + O * Cp)
    bytes_accessed = (n_tiles * B * Cp * Mp * 2 + F_ * Mp * Np * 2
                      + B * O * Np * 4 + F_ * O * Cp * 2 + O * 4)

    out = pl.pallas_call(
        _fused_conv_kernel,
        out_shape=jax.ShapeDtypeStruct((B, O, Np), jnp.float32),
        grid_spec=pltpu.PrefetchScalarGridSpec(
            num_scalar_prefetch=0,
            # N tiles outer, batch inner: the weight block index is constant over
            # the inner batch loop, so it is fetched once per N tile.
            grid=(n_tiles, B),
            in_specs=[
                pl.BlockSpec((pl.Squeezed(), Cp, Mp), lambda j, b: (b, 0, 0)),
                pl.BlockSpec((F_, Mp, tile_n), lambda j, b: (0, 0, j)),
                pl.BlockSpec((F_, O, Cp), lambda j, b: (0, 0, 0)),
                pl.BlockSpec((O, 1), lambda j, b: (0, 0)),
            ],
            out_specs=pl.BlockSpec((pl.Squeezed(), O, tile_n),
                                   lambda j, b: (b, 0, j)),
        ),
        compiler_params=pltpu.CompilerParams(
            dimension_semantics=("parallel", "parallel"),
            vmem_limit_bytes=vmem_bytes,
        ),
        cost_estimate=pl.CostEstimate(
            flops=flops, transcendentals=0, bytes_accessed=bytes_accessed),
    )(xp, wg, wc3, bias2d)

    return out[:, :, :N]


# ----------------------------------------------------------------------------
# Demo / correctness check
# ----------------------------------------------------------------------------

if __name__ == "__main__":
    # Small deterministic setup consistent with the module:
    #   l1 = l2: 16 points on a 4x4 grid in [-1, 1]^2  (M = N = 16)
    #   k = 9 neighbors, sigma = 1.0, max_ord = 2 -> F = 6 basis filters
    #   in_channels C = 4, out_channels O = 8, batch B = 2
    B, C, O = 2, 4, 8
    k_nn, sigma, max_ord = 9, 1.0, 2

    grid_1d = jnp.linspace(-1.0, 1.0, 4, dtype=jnp.float32)
    gx, gy = jnp.meshgrid(grid_1d, grid_1d, indexing="ij")
    l1 = jnp.stack([gx.reshape(-1), gy.reshape(-1)], axis=-1)        # (16, 2)
    l2 = l1
    M, N = l1.shape[0], l2.shape[0]

    patches, idx = compute_support(l1, l2, k_nn)                     # (N, K, 2), (N, K)
    fw = compute_filter_weights(patches, sigma, max_ord)             # (F, N, K)
    F = fw.shape[0]

    key = jax.random.PRNGKey(0)
    kx, kw, kb = jax.random.split(key, 3)
    x = jax.random.normal(kx, (B, C, M), dtype=jnp.float32)
    conv_w = 0.1 * jax.random.normal(kw, (O, F * C), dtype=jnp.float32)
    conv_b = 0.1 * jax.random.normal(kb, (O,), dtype=jnp.float32)

    out = conv_forward(x, fw, idx, conv_w, conv_b)
    out = jax.block_until_ready(out)

    # Pure-JAX f32 reference mirroring the PyTorch Conv.forward exactly.
    xg = x[:, :, idx]                                                # (B, C, N, K)
    y_ref = jnp.einsum("bcnk,fnk->bfcn", xg, fw).reshape(B, F * C, N)
    ref = jnp.einsum("oi,bin->bon", conv_w, y_ref) + conv_b[None, :, None]

    assert out.shape == (B, O, N), out.shape
    # bf16 MXU inputs with f32 accumulation -> loosened tolerance vs f32 ref.
    assert jnp.allclose(out, ref, atol=3e-2, rtol=5e-2), "mismatch vs reference"

    print("KERNEL_OK")
</pallas_src>

<mosaic_0001>
module attributes {stable_mosaic.version = 11 : i64} {
  func.func @_fused_conv_kernel(%arg0: i32, %arg1: i32, %arg2: memref<1x8x128xbf16, #tpu.memory_space<vmem>>, %arg3: memref<6x128x128xbf16, #tpu.memory_space<vmem>>, %arg4: memref<6x8x8xbf16, #tpu.memory_space<vmem>>, %arg5: memref<8x1xf32, #tpu.memory_space<vmem>>, %arg6: memref<1x8x128xf32, #tpu.memory_space<vmem>>) attributes {dimension_semantics = [#tpu.dimension_semantics<parallel>, #tpu.dimension_semantics<parallel>], iteration_bounds = array<i64: 1, 2>, scalar_prefetch = 0 : i64, scratch_operands = 0 : i64, tpu.core_type = #tpu.core_type<tc>, window_params = [{transform_indices = @transform_0, window_bounds = array<i64: 1, 8, 128>}, {transform_indices = @transform_1, window_bounds = array<i64: 6, 128, 128>}, {pipeline_mode = #tpu.pipeline_mode<synchronous>, transform_indices = @transform_2, window_bounds = array<i64: 6, 8, 8>}, {pipeline_mode = #tpu.pipeline_mode<synchronous>, transform_indices = @transform_3, window_bounds = array<i64: 8, 1>}, {transform_indices = @transform_4, window_bounds = array<i64: 1, 8, 128>}]} {
    %c0 = arith.constant 0 : index
    %c0_0 = arith.constant 0 : index
    %c0_1 = arith.constant 0 : index
    %0 = vector.load %arg2[%c0, %c0_0, %c0_1] : memref<1x8x128xbf16, #tpu.memory_space<vmem>>, vector<1x8x128xbf16>
    %1 = vector.shape_cast %0 : vector<1x8x128xbf16> to vector<8x128xbf16>
    %cst = arith.constant 0.000000e+00 : f32
    %2 = vector.broadcast %cst : f32 to vector<8x128xf32>
    %c0_2 = arith.constant 0 : index
    %c0_3 = arith.constant 0 : index
    %c0_4 = arith.constant 0 : index
    %3 = vector.load %arg3[%c0_2, %c0_3, %c0_4] : memref<6x128x128xbf16, #tpu.memory_space<vmem>>, vector<1x128x128xbf16>
    %4 = vector.shape_cast %3 : vector<1x128x128xbf16> to vector<128x128xbf16>
    %cst_5 = arith.constant dense<0.000000e+00> : vector<8x128xf32>
    %5 = tpu.matmul %1, %4, %cst_5 {dimension_numbers = #tpu.dot_dimension_numbers<[1], [0], [0], [1], [0, 0, 1, 1], [], []>} : vector<8x128xbf16>, vector<128x128xbf16>, vector<8x128xf32> -> vector<8x128xf32>
    %c0_6 = arith.constant 0 : index
    %c0_7 = arith.constant 0 : index
    %c0_8 = arith.constant 0 : index
    %6 = vector.load %arg4[%c0_6, %c0_7, %c0_8] : memref<6x8x8xbf16, #tpu.memory_space<vmem>>, vector<1x8x8xbf16>
    %7 = vector.shape_cast %6 : vector<1x8x8xbf16> to vector<8x8xbf16>
    %8 = arith.truncf %5 : vector<8x128xf32> to vector<8x128xbf16>
    %cst_9 = arith.constant dense<0.000000e+00> : vector<8x128xf32>
    %9 = tpu.matmul %7, %8, %cst_9 {dimension_numbers = #tpu.dot_dimension_numbers<[1], [0], [0], [1], [0, 0, 1, 1], [], []>} : vector<8x8xbf16>, vector<8x128xbf16>, vector<8x128xf32> -> vector<8x128xf32>
    %10 = arith.addf %2, %9 : vector<8x128xf32>
    %c1 = arith.constant 1 : index
    %c0_10 = arith.constant 0 : index
    %c0_11 = arith.constant 0 : index
    %11 = vector.load %arg3[%c1, %c0_10, %c0_11] : memref<6x128x128xbf16, #tpu.memory_space<vmem>>, vector<1x128x128xbf16>
    %12 = vector.shape_cast %11 : vector<1x128x128xbf16> to vector<128x128xbf16>
    %cst_12 = arith.constant dense<0.000000e+00> : vector<8x128xf32>
    %13 = tpu.matmul %1, %12, %cst_12 {dimension_numbers = #tpu.dot_dimension_numbers<[1], [0], [0], [1], [0, 0, 1, 1], [], []>} : vector<8x128xbf16>, vector<128x128xbf16>, vector<8x128xf32> -> vector<8x128xf32>
    %c1_13 = arith.constant 1 : index
    %c0_14 = arith.constant 0 : index
    %c0_15 = arith.constant 0 : index
    %14 = vector.load %arg4[%c1_13, %c0_14, %c0_15] : memref<6x8x8xbf16, #tpu.memory_space<vmem>>, vector<1x8x8xbf16>
    %15 = vector.shape_cast %14 : vector<1x8x8xbf16> to vector<8x8xbf16>
    %16 = arith.truncf %13 : vector<8x128xf32> to vector<8x128xbf16>
    %cst_16 = arith.constant dense<0.000000e+00> : vector<8x128xf32>
    %17 = tpu.matmul %15, %16, %cst_16 {dimension_numbers = #tpu.dot_dimension_numbers<[1], [0], [0], [1], [0, 0, 1, 1], [], []>} : vector<8x8xbf16>, vector<8x128xbf16>, vector<8x128xf32> -> vector<8x128xf32>
    %18 = arith.addf %10, %17 : vector<8x128xf32>
    %c2 = arith.constant 2 : index
    %c0_17 = arith.constant 0 : index
    %c0_18 = arith.constant 0 : index
    %19 = vector.load %arg3[%c2, %c0_17, %c0_18] : memref<6x128x128xbf16, #tpu.memory_space<vmem>>, vector<1x128x128xbf16>
    %20 = vector.shape_cast %19 : vector<1x128x128xbf16> to vector<128x128xbf16>
    %cst_19 = arith.constant dense<0.000000e+00> : vector<8x128xf32>
    %21 = tpu.matmul %1, %20, %cst_19 {dimension_numbers = #tpu.dot_dimension_numbers<[1], [0], [0], [1], [0, 0, 1, 1], [], []>} : vector<8x128xbf16>, vector<128x128xbf16>, vector<8x128xf32> -> vector<8x128xf32>
    %c2_20 = arith.constant 2 : index
    %c0_21 = arith.constant 0 : index
    %c0_22 = arith.constant 0 : index
    %22 = vector.load %arg4[%c2_20, %c0_21, %c0_22] : memref<6x8x8xbf16, #tpu.memory_space<vmem>>, vector<1x8x8xbf16>
    %23 = vector.shape_cast %22 : vector<1x8x8xbf16> to vector<8x8xbf16>
    %24 = arith.truncf %21 : vector<8x128xf32> to vector<8x128xbf16>
    %cst_23 = arith.constant dense<0.000000e+00> : vector<8x128xf32>
    %25 = tpu.matmul %23, %24, %cst_23 {dimension_numbers = #tpu.dot_dimension_numbers<[1], [0], [0], [1], [0, 0, 1, 1], [], []>} : vector<8x8xbf16>, vector<8x128xbf16>, vector<8x128xf32> -> vector<8x128xf32>
    %26 = arith.addf %18, %25 : vector<8x128xf32>
    %c3 = arith.constant 3 : index
    %c0_24 = arith.constant 0 : index
    %c0_25 = arith.constant 0 : index
    %27 = vector.load %arg3[%c3, %c0_24, %c0_25] : memref<6x128x128xbf16, #tpu.memory_space<vmem>>, vector<1x128x128xbf16>
    %28 = vector.shape_cast %27 : vector<1x128x128xbf16> to vector<128x128xbf16>
    %cst_26 = arith.constant dense<0.000000e+00> : vector<8x128xf32>
    %29 = tpu.matmul %1, %28, %cst_26 {dimension_numbers = #tpu.dot_dimension_numbers<[1], [0], [0], [1], [0, 0, 1, 1], [], []>} : vector<8x128xbf16>, vector<128x128xbf16>, vector<8x128xf32> -> vector<8x128xf32>
    %c3_27 = arith.constant 3 : index
    %c0_28 = arith.constant 0 : index
    %c0_29 = arith.constant 0 : index
    %30 = vector.load %arg4[%c3_27, %c0_28, %c0_29] : memref<6x8x8xbf16, #tpu.memory_space<vmem>>, vector<1x8x8xbf16>
    %31 = vector.shape_cast %30 : vector<1x8x8xbf16> to vector<8x8xbf16>
    %32 = arith.truncf %29 : vector<8x128xf32> to vector<8x128xbf16>
    %cst_30 = arith.constant dense<0.000000e+00> : vector<8x128xf32>
    %33 = tpu.matmul %31, %32, %cst_30 {dimension_numbers = #tpu.dot_dimension_numbers<[1], [0], [0], [1], [0, 0, 1, 1], [], []>} : vector<8x8xbf16>, vector<8x128xbf16>, vector<8x128xf32> -> vector<8x128xf32>
    %34 = arith.addf %26, %33 : vector<8x128xf32>
    %c4 = arith.constant 4 : index
    %c0_31 = arith.constant 0 : index
    %c0_32 = arith.constant 0 : index
    %35 = vector.load %arg3[%c4, %c0_31, %c0_32] : memref<6x128x128xbf16, #tpu.memory_space<vmem>>, vector<1x128x128xbf16>
    %36 = vector.shape_cast %35 : vector<1x128x128xbf16> to vector<128x128xbf16>
    %cst_33 = arith.constant dense<0.000000e+00> : vector<8x128xf32>
    %37 = tpu.matmul %1, %36, %cst_33 {dimension_numbers = #tpu.dot_dimension_numbers<[1], [0], [0], [1], [0, 0, 1, 1], [], []>} : vector<8x128xbf16>, vector<128x128xbf16>, vector<8x128xf32> -> vector<8x128xf32>
    %c4_34 = arith.constant 4 : index
    %c0_35 = arith.constant 0 : index
    %c0_36 = arith.constant 0 : index
    %38 = vector.load %arg4[%c4_34, %c0_35, %c0_36] : memref<6x8x8xbf16, #tpu.memory_space<vmem>>, vector<1x8x8xbf16>
    %39 = vector.shape_cast %38 : vector<1x8x8xbf16> to vector<8x8xbf16>
    %40 = arith.truncf %37 : vector<8x128xf32> to vector<8x128xbf16>
    %cst_37 = arith.constant dense<0.000000e+00> : vector<8x128xf32>
    %41 = tpu.matmul %39, %40, %cst_37 {dimension_numbers = #tpu.dot_dimension_numbers<[1], [0], [0], [1], [0, 0, 1, 1], [], []>} : vector<8x8xbf16>, vector<8x128xbf16>, vector<8x128xf32> -> vector<8x128xf32>
    %42 = arith.addf %34, %41 : vector<8x128xf32>
    %c5 = arith.constant 5 : index
    %c0_38 = arith.constant 0 : index
    %c0_39 = arith.constant 0 : index
    %43 = vector.load %arg3[%c5, %c0_38, %c0_39] : memref<6x128x128xbf16, #tpu.memory_space<vmem>>, vector<1x128x128xbf16>
    %44 = vector.shape_cast %43 : vector<1x128x128xbf16> to vector<128x128xbf16>
    %cst_40 = arith.constant dense<0.000000e+00> : vector<8x128xf32>
    %45 = tpu.matmul %1, %44, %cst_40 {dimension_numbers = #tpu.dot_dimension_numbers<[1], [0], [0], [1], [0, 0, 1, 1], [], []>} : vector<8x128xbf16>, vector<128x128xbf16>, vector<8x128xf32> -> vector<8x128xf32>
    %c5_41 = arith.constant 5 : index
    %c0_42 = arith.constant 0 : index
    %c0_43 = arith.constant 0 : index
    %46 = vector.load %arg4[%c5_41, %c0_42, %c0_43] : memref<6x8x8xbf16, #tpu.memory_space<vmem>>, vector<1x8x8xbf16>
    %47 = vector.shape_cast %46 : vector<1x8x8xbf16> to vector<8x8xbf16>
    %48 = arith.truncf %45 : vector<8x128xf32> to vector<8x128xbf16>
    %cst_44 = arith.constant dense<0.000000e+00> : vector<8x128xf32>
    %49 = tpu.matmul %47, %48, %cst_44 {dimension_numbers = #tpu.dot_dimension_numbers<[1], [0], [0], [1], [0, 0, 1, 1], [], []>} : vector<8x8xbf16>, vector<8x128xbf16>, vector<8x128xf32> -> vector<8x128xf32>
    %50 = arith.addf %42, %49 : vector<8x128xf32>
    %c0_45 = arith.constant 0 : index
    %c0_46 = arith.constant 0 : index
    %51 = vector.load %arg5[%c0_45, %c0_46] : memref<8x1xf32, #tpu.memory_space<vmem>>, vector<8x1xf32>
    %52 = vector.broadcast %51 : vector<8x1xf32> to vector<8x128xf32>
    %53 = arith.addf %50, %52 : vector<8x128xf32>
    %c0_47 = arith.constant 0 : index
    %c0_48 = arith.constant 0 : index
    %c0_49 = arith.constant 0 : index
    %54 = vector.load %arg6[%c0_47, %c0_48, %c0_49] : memref<1x8x128xf32, #tpu.memory_space<vmem>>, vector<1x8x128xf32>
    %55 = vector.shape_cast %54 : vector<1x8x128xf32> to vector<8x128xf32>
    %56 = vector.shape_cast %53 : vector<8x128xf32> to vector<1x8x128xf32>
    tpu.vector_store %arg6[%c0_47, %c0_48, %c0_49], %56 {strides = array<i32>} : memref<1x8x128xf32, #tpu.memory_space<vmem>>, vector<1x8x128xf32>,
    return
  }
  func.func @transform_0(%arg0: i32, %arg1: i32) -> (i32, i32, i32) {
    %c0_i32 = arith.constant 0 : i32
    %c0_i32_0 = arith.constant 0 : i32
    %c0_i32_1 = arith.constant 0 : i32
    return %arg1, %c0_i32, %c0_i32_0 : i32, i32, i32
  }
  func.func @transform_1(%arg0: i32, %arg1: i32) -> (i32, i32, i32) {
    %c0_i32 = arith.constant 0 : i32
    %c0_i32_0 = arith.constant 0 : i32
    %c0_i32_1 = arith.constant 0 : i32
    return %c0_i32, %c0_i32_0, %arg0 : i32, i32, i32
  }
  func.func @transform_2(%arg0: i32, %arg1: i32) -> (i32, i32, i32) {
    %c0_i32 = arith.constant 0 : i32
    %c0_i32_0 = arith.constant 0 : i32
    %c0_i32_1 = arith.constant 0 : i32
    %c0_i32_2 = arith.constant 0 : i32
    return %c0_i32, %c0_i32_0, %c0_i32_1 : i32, i32, i32
  }
  func.func @transform_3(%arg0: i32, %arg1: i32) -> (i32, i32) {
    %c0_i32 = arith.constant 0 : i32
    %c0_i32_0 = arith.constant 0 : i32
    %c0_i32_1 = arith.constant 0 : i32
    return %c0_i32, %c0_i32_0 : i32, i32
  }
  func.func @transform_4(%arg0: i32, %arg1: i32) -> (i32, i32, i32) {
    %c0_i32 = arith.constant 0 : i32
    %c0_i32_0 = arith.constant 0 : i32
    return %arg1, %c0_i32, %arg0 : i32, i32, i32
  }
}

</mosaic_0001>

<llo_original>
// kernel: conv_forward.1
$region0: #{conv_forward.1}
  #allocation0 [shape = 'u32[]', space=smem, size = 0x4, offset = 0x4, fixed_abs, tag = 'smem constant byte address 0x4 - core index']
  #allocation1 [shape = 'u32[144,128]{1,0:T(1,128)}', space=vmem, size = 0x12000, scoped, tag = 'internal scratch']
  %s0 = inlined_call_operand.vmem [shape: bf16[2,8,128], index: 0, kind: input, shape index: {}]
  %s1 = inlined_call_operand.vmem [shape: bf16[6,128,128], index: 1, kind: input, shape index: {}]
  %s2 = inlined_call_operand.vmem [shape: bf16[6,8,8], index: 2, kind: input, shape index: {}]
  %s3 = inlined_call_operand.vmem [shape: f32[8,1], index: 3, kind: input, shape index: {}]
  %s4 = inlined_call_operand.hbm [shape: f32[2,8,128], index: 4, kind: output, shape index: {}]
  %s5 = sld [smem:[#allocation0]]
  $region49: #{conv_forward.1} parent=0
    _
  %s7 = ssub.s32 1, %s5
  %s8 = scalar_select 0, %s7, %s5
  $region1: #{conv_forward.1} parent=0
    #allocation2 [shape = 'u8[8192]{0}', space=vmem, size = 0x2000, scoped, tag = 'output window, operand 0']
    #allocation3 [shape = 's32[2]{0}', space=sflag, size = 0x8, scoped, tag = 'scoped memory for conv_forward.1']
    %9 = vsyncpa [#allocation3], 0
    %s10 = scalar_lea.sflag [#allocation3], 1
    %11 = vsyncpa %s10, 0
    loop: start=0, step=1, limit=4
    $region2: #{conv_forward.1} parent=1 // loop_pre_header
      _
    $region3: #{conv_forward.1} parent=1 // loop_header
      %s13 = sphi 0, %s17
      %p14 = scmp.ge.s32.totalorder %s13, 4
      %s20 = sphi 0, %s32
      %s21 = sphi 0, %s28
      %s22 = sphi 0, %s20
      %s23 = sphi 0, %s21
      %s24 = sphi 0, %s22
      %s25 = sphi 0, %s23
      %s35 = sphi 0, %s37
      %s38 = sphi 0, %s35
      %s39 = sphi 0, %s38
      %s55 = sphi 0, %s39
      %s61 = sphi 0, %s63
      %s64 = sphi 0, %s61
      %s65 = sphi 0, %s64
      %s81 = sphi 0, %s65
      %s85 = sphi 0, %s85
      %s87 = sphi 0, %s85
      %s88 = sphi 0, %s87
      %s102 = sphi 0, %s88
      %s106 = sphi 0, %s106
      %s108 = sphi 0, %s106
      %s109 = sphi 0, %s108
      %s123 = sphi 0, %s109
      %s131 = sphi 0, %s133
      %s134 = sphi 0, %s131
      %s135 = sphi 0, %s134
      %s151 = sphi 0, %s135
    $region4: #{conv_forward.1} parent=1 // loop_header_branch
      %16 = sbr.rel (%p14) target = $region8
    $region5: #{conv_forward.1} parent=1 // loop_body
      %s18 = ssub.s32 %s13, 1
      %s19 = ssub.s32 %s13, 2
      %s26 = sadd.s32 1, %s21
      %p27 = scmp.ge.s32.totalorder %s26, 2
      %s28 = scalar_select %p27, 0, %s26
      %s29 = sadd.s32 1, %s20
      %s30 = scalar_select %p27, %s29, %s20
      %p31 = scmp.ge.s32.totalorder %s30, 1
      %s32 = scalar_select %p31, 0, %s30
      %s33 = ssub.s32 %s21, %s28
      %p34 = scmp.eq.s32.totalorder %s33, 0
      %s36 = sadd.s32 %s35, 1
      %s37 = scalar_select %p34, %s35, %s36
      %p40 = pneg %p34
      %p41 = scmp.eq.s32.totalorder %s13, 1
      %p42 = por %p40, %p41
      %p43 = scmp.ne.s32.totalorder %s35, %s38
      %p44 = scmp.eq.s32.totalorder %s13, 0
      %p45 = por %p43, %p44
      %p46 = scmp.ne.s32.totalorder %s35, %s38
      %p47 = scmp.eq.s32.totalorder %s18, 1
      %p48 = por %p46, %p47
      %p49 = scmp.ne.s32.totalorder %s38, %s39
      %p50 = scmp.eq.s32.totalorder %s18, 0
      %p51 = por %p49, %p50
      %p52 = scmp.ne.s32.totalorder %s38, %s39
      %p53 = scmp.eq.s32.totalorder %s19, 1
      %p54 = por %p52, %p53
      %p56 = scmp.ne.s32.totalorder %s39, %s55
      %p57 = scmp.eq.s32.totalorder %s19, 0
      %p58 = por %p56, %p57
      %s59 = ssub.s32 %s20, %s32
      %p60 = scmp.eq.s32.totalorder %s59, 0
      %s62 = sadd.s32 %s61, 1
      %s63 = scalar_select %p60, %s61, %s62
      %p66 = pneg %p60
      %p67 = scmp.eq.s32.totalorder %s13, 1
      %p68 = por %p66, %p67
      %p69 = scmp.ne.s32.totalorder %s61, %s64
      %p70 = scmp.eq.s32.totalorder %s13, 0
      %p71 = por %p69, %p70
      %p72 = scmp.ne.s32.totalorder %s61, %s64
      %p73 = scmp.eq.s32.totalorder %s18, 1
      %p74 = por %p72, %p73
      %p75 = scmp.ne.s32.totalorder %s64, %s65
      %p76 = scmp.eq.s32.totalorder %s18, 0
      %p77 = por %p75, %p76
      %p78 = scmp.ne.s32.totalorder %s64, %s65
      %p79 = scmp.eq.s32.totalorder %s19, 1
      %p80 = por %p78, %p79
      %p82 = scmp.ne.s32.totalorder %s65, %s81
      %p83 = scmp.eq.s32.totalorder %s19, 0
      %p84 = por %p82, %p83
      %s86 = sadd.s32 %s85, 1
      %p89 = scmp.eq.s32.totalorder %s13, 1
      %p90 = scmp.ne.s32.totalorder %s85, %s87
      %p91 = scmp.eq.s32.totalorder %s13, 0
      %p92 = por %p90, %p91
      %p93 = scmp.ne.s32.totalorder %s85, %s87
      %p94 = scmp.eq.s32.totalorder %s18, 1
      %p95 = por %p93, %p94
      %p96 = scmp.ne.s32.totalorder %s87, %s88
      %p97 = scmp.eq.s32.totalorder %s18, 0
      %p98 = por %p96, %p97
      %p99 = scmp.ne.s32.totalorder %s87, %s88
      %p100 = scmp.eq.s32.totalorder %s19, 1
      %p101 = por %p99, %p100
      %p103 = scmp.ne.s32.totalorder %s88, %s102
      %p104 = scmp.eq.s32.totalorder %s19, 0
      %p105 = por %p103, %p104
      %s107 = sadd.s32 %s106, 1
      %p110 = scmp.eq.s32.totalorder %s13, 1
      %p111 = scmp.ne.s32.totalorder %s106, %s108
      %p112 = scmp.eq.s32.totalorder %s13, 0
      %p113 = por %p111, %p112
      %p114 = scmp.ne.s32.totalorder %s106, %s108
      %p115 = scmp.eq.s32.totalorder %s18, 1
      %p116 = por %p114, %p115
      %p117 = scmp.ne.s32.totalorder %s108, %s109
      %p118 = scmp.eq.s32.totalorder %s18, 0
      %p119 = por %p117, %p118
      %p120 = scmp.ne.s32.totalorder %s108, %s109
      %p121 = scmp.eq.s32.totalorder %s19, 1
      %p122 = por %p120, %p121
      %p124 = scmp.ne.s32.totalorder %s109, %s123
      %p125 = scmp.eq.s32.totalorder %s19, 0
      %p126 = por %p124, %p125
      %s127 = ssub.s32 %s21, %s28
      %s128 = ssub.s32 %s20, %s32
      %s129 = sor.u32 %s127, %s128
      %p130 = scmp.eq.s32.totalorder %s129, 0
      %s132 = sadd.s32 %s131, 1
      %s133 = scalar_select %p130, %s131, %s132
      %p136 = pneg %p130
      %p137 = scmp.eq.s32.totalorder %s13, 1
      %p138 = por %p136, %p137
      %p139 = scmp.ne.s32.totalorder %s131, %s134
      %p140 = scmp.eq.s32.totalorder %s13, 0
      %p141 = por %p139, %p140
      %p142 = scmp.ne.s32.totalorder %s131, %s134
      %p143 = scmp.eq.s32.totalorder %s18, 1
      %p144 = por %p142, %p143
      %p145 = scmp.ne.s32.totalorder %s134, %s135
      %p146 = scmp.eq.s32.totalorder %s18, 0
      %p147 = por %p145, %p146
      %p148 = scmp.ne.s32.totalorder %s134, %s135
      %p149 = scmp.eq.s32.totalorder %s19, 1
      %p150 = por %p148, %p149
      %p152 = scmp.ne.s32.totalorder %s135, %s151
      %p153 = scmp.eq.s32.totalorder %s19, 0
      %p154 = por %p152, %p153
      %p155 = scmp.le.s32.totalorder 1, %s13
      %p156 = scmp.lt.s32.totalorder %s13, 3
      %p157 = pnand %p155, %p156
      %p158 = pneg %p157
      // Predicated region
      $region9: #{conv_forward.1} parent=5 // pred_check
        _
      $region10: #{conv_forward.1} parent=5 // pred_check_branch
        %160 = sbr.rel (%p157) target = $region12
      $region11: #{conv_forward.1} parent=5 // pred_region
        %s161 = ssub.s32 %s13, 1
        // Predicated region
        $region13: #{conv_forward.1} parent=11 // pred_check
          %p162 = pneg %p77
        $region14: #{conv_forward.1} parent=11 // pred_check_branch
          %164 = sbr.rel (%p162) target = $region16
        $region15: #{conv_forward.1} parent=11 // pred_region
          %p165 = scmp.lt.s32.totalorder %s22, 0
          %s166 = scalar_select %p165, %s22, 0
          %s167 = smul.addr %s166, 4
          %s168 = scalar_lea.vmem %s1, %s167
        $region16: #{conv_forward.1} parent=11 // pred_fallthru
          _
        // Predicated region
        $region17: #{conv_forward.1} parent=11 // pred_check
          %p169 = pneg %p98
        $region18: #{conv_forward.1} parent=11 // pred_check_branch
          %171 = sbr.rel (%p169) target = $region20
        $region19: #{conv_forward.1} parent=11 // pred_region
          _
        $region20: #{conv_forward.1} parent=11 // pred_fallthru
          _
        // Predicated region
        $region21: #{conv_forward.1} parent=11 // pred_check
          %p172 = pneg %p119
        $region22: #{conv_forward.1} parent=11 // pred_check_branch
          %174 = sbr.rel (%p172) target = $region24
        $region23: #{conv_forward.1} parent=11 // pred_region
          _
        $region24: #{conv_forward.1} parent=11 // pred_fallthru
          _
      $region12: #{conv_forward.1} parent=5 // pred_fallthru
        _
      %p175 = scmp.lt.s32.totalorder %s13, 2
      // Predicated region
      $region25: #{conv_forward.1} parent=5 // pred_check
        %p176 = pneg %p175
      $region26: #{conv_forward.1} parent=5 // pred_check_branch
        %178 = sbr.rel (%p176) target = $region28
      $region27: #{conv_forward.1} parent=5 // pred_region
        // Predicated region
        $region29: #{conv_forward.1} parent=27 // pred_check
          %p179 = pneg %p45
        $region30: #{conv_forward.1} parent=27 // pred_check_branch
          %181 = sbr.rel (%p179) target = $region32
        $region31: #{conv_forward.1} parent=27 // pred_region
          %p182 = scmp.lt.s32.totalorder %s21, 1
          %s183 = scalar_select %p182, %s21, 1
          %s184 = smul.addr %s183, 4
          %s185 = scalar_lea.vmem %s0, %s184
        $region32: #{conv_forward.1} parent=27 // pred_fallthru
          _
      $region28: #{conv_forward.1} parent=5 // pred_fallthru
        _
      %p186 = scmp.le.s32.totalorder 1, %s13
      %p187 = scmp.lt.s32.totalorder %s13, 3
      %p188 = pnand %p186, %p187
      %p189 = pneg %p188
      // Predicated region
      $region33: #{conv_forward.1} parent=5 // pred_check
        _
      $region34: #{conv_forward.1} parent=5 // pred_check_branch
        %191 = sbr.rel (%p188) target = $region36
      $region35: #{conv_forward.1} parent=5 // pred_region
        %s192 = ssub.s32 %s13, 1
        %p193 = scmp.lt.s32.totalorder %s23, 1
        %s194 = scalar_select %p193, %s23, 1
        %s195 = smul.addr %s194, 4
        %s196 = scalar_lea.vmem %s0, %s195
        %p197 = pneg %p51
        %p198 = pneg %p48
        %p199 = scmp.lt.s32.totalorder %s22, 0
        %s200 = scalar_select %p199, %s22, 0
        %s201 = smul.addr %s200, 4
        %s202 = scalar_lea.vmem %s1, %s201
        %p203 = pneg %p77
        %p204 = pneg %p74
        %p205 = pneg %p98
        %p206 = pneg %p95
        %p207 = pneg %p119
        %p208 = pneg %p116
        %p209 = pneg %p147
        %p210 = pneg %p144
        %s211 = sand.u32 %s134, 1
        %s212 = scalar_lea.sflag [#allocation3], %s211
        %s213 = sand.u32 %s134, 1
        %s214 = smul.addr %s213, 8
        %s215 = scalar_lea.vmem [#allocation2], %s214
        %p216 = scmp.lt.s32.totalorder %s23, 1
        %s217 = scalar_select %p216, %s23, 1
        %s218 = smul.addr %s217, 4
        %s219 = scalar_lea.vmem %s0, %s218
        %p220 = scmp.lt.s32.totalorder %s22, 0
        %s221 = scalar_select %p220, %s22, 0
        %s222 = smul.addr %s221, 4
        %s223 = scalar_lea.vmem %s1, %s222
        %v225 = vld [vmem:[%s219] sm:$0xf]
        %v226 = vld [vmem:[%s223] sm:$0xf]
        %v227 = vld [vmem:[%s223 + $0x4] sm:$0xf]
        %v228 = vld [vmem:[%s223 + $0x8] sm:$0xf]
        %v229 = vld [vmem:[%s223 + $0xc] sm:$0xf]
        %v230 = vld [vmem:[%s223 + $0x10] sm:$0xf]
        %v231 = vld [vmem:[%s223 + $0x14] sm:$0xf]
        %v232 = vld [vmem:[%s223 + $0x18] sm:$0xf]
        %v233 = vld [vmem:[%s223 + $0x1c] sm:$0xf]
        %v234 = vld [vmem:[%s223 + $0x20] sm:$0xf]
        %v235 = vld [vmem:[%s223 + $0x24] sm:$0xf]
        %v236 = vld [vmem:[%s223 + $0x28] sm:$0xf]
        %v237 = vld [vmem:[%s223 + $0x2c] sm:$0xf]
        %v238 = vld [vmem:[%s223 + $0x30] sm:$0xf]
        %v239 = vld [vmem:[%s223 + $0x34] sm:$0xf]
        %v240 = vld [vmem:[%s223 + $0x38] sm:$0xf]
        %v241 = vld [vmem:[%s223 + $0x3c] sm:$0xf]
        %v258 = vunpack.c.l.b16 %v226
        %v259 = vunpack.c.l.b16 %v227
        %v260 = vunpack.c.l.b16 %v228
        %v261 = vunpack.c.l.b16 %v229
        %v262 = vunpack.c.l.b16 %v230
        %v263 = vunpack.c.l.b16 %v231
        %v264 = vunpack.c.l.b16 %v232
        %v265 = vunpack.c.l.b16 %v233
        %v266 = vunpack.c.l.b16 %v234
        %v267 = vunpack.c.l.b16 %v235
        %v268 = vunpack.c.l.b16 %v236
        %v269 = vunpack.c.l.b16 %v237
        %v270 = vunpack.c.l.b16 %v238
        %v271 = vunpack.c.l.b16 %v239
        %v272 = vunpack.c.l.b16 %v240
        %v273 = vunpack.c.l.b16 %v241
        %v274 = vpack.c.b16 %v259, %v258
        %v275 = vpack.c.b16 %v261, %v260
        %v276 = vpack.c.b16 %v263, %v262
        %v277 = vpack.c.b16 %v265, %v264
        %v278 = vpack.c.b16 %v267, %v266
        %v279 = vpack.c.b16 %v269, %v268
        %v280 = vpack.c.b16 %v271, %v270
        %v281 = vpack.c.b16 %v273, %v272
        %290 = vmatprep.subr.bf16.mxu0 0
        %291 = vmatpush1.bf16.msra.mxu0 %v274
        %292 = vmatprep.subr.bf16.mxu0 0
        %293 = vmatpush1.bf16.msra.mxu0 %v275
        %294 = vmatprep.subr.bf16.mxu0 0
        %295 = vmatpush1.bf16.msra.mxu0 %v276
        %296 = vmatprep.subr.bf16.mxu0 0
        %297 = vmatpush1.bf16.msra.mxu0 %v277
        %298 = vmatprep.subr.bf16.mxu0 0
        %299 = vmatpush1.bf16.msra.mxu0 %v278
        %300 = vmatprep.subr.bf16.mxu0 0
        %301 = vmatpush1.bf16.msra.mxu0 %v279
        %302 = vmatprep.subr.bf16.mxu0 0
        %303 = vmatpush1.bf16.msra.mxu0 %v280
        %304 = vmatprep.subr.bf16.mxu0 0
        %305 = vmatpush1.bf16.msra.mxu0 %v281
        %306 = vmatprep.subr.bf16.mxu0 0
        %307 = vmatpush1.bf16.msra.mxu0 0
        %308 = vmatprep.subr.bf16.mxu0 0
        %309 = vmatpush1.bf16.msra.mxu0 0
        %310 = vmatprep.subr.bf16.mxu0 0
        %311 = vmatpush1.bf16.msra.mxu0 0
        %312 = vmatprep.subr.bf16.mxu0 0
        %313 = vmatpush1.bf16.msra.mxu0 0
        %314 = vmatprep.subr.bf16.mxu0 0
        %315 = vmatpush1.bf16.msra.mxu0 0
        %316 = vmatprep.subr.bf16.mxu0 0
        %317 = vmatpush1.bf16.msra.mxu0 0
        %318 = vmatprep.subr.bf16.mxu0 0
        %319 = vmatpush1.bf16.msra.mxu0 0
        %320 = vmatprep.subr.bf16.mxu0 0
        %321 = vmatpush1.bf16.msra.mxu0 0
        %322 = vmatprep.mubr.bf16.mxu0 0
        %323 = vmatmul.mubr.bf16.gmra.mrb[0].mxu0 %v225
        %v324 = vpop.f32.mrb[0].mxu0
        %v325 = vadd.f32 0.0, %v324
        %v326 = vpop.f32.mrb[0].mxu0
        %v327 = vpop.f32.mrb[0].mxu0
        %v328 = vpop.f32.mrb[0].mxu0
        %329 = vdwg.mxu0
        %v330 = vld [vmem:[%s2] sm:$0xf]
        %v331 = vpack.c.bf16 %v325, %v325
        %s332 = scalar_lea.vmem %s223, 64
        %v333 = vld [vmem:[%s332] sm:$0xf]
        %v334 = vld [vmem:[%s332 + $0x4] sm:$0xf]
        %v335 = vld [vmem:[%s332 + $0x8] sm:$0xf]
        %v336 = vld [vmem:[%s332 + $0xc] sm:$0xf]
        %v337 = vld [vmem:[%s332 + $0x10] sm:$0xf]
        %v338 = vld [vmem:[%s332 + $0x14] sm:$0xf]
        %v339 = vld [vmem:[%s332 + $0x18] sm:$0xf]
        %v340 = vld [vmem:[%s332 + $0x1c] sm:$0xf]
        %v341 = vld [vmem:[%s332 + $0x20] sm:$0xf]
        %v342 = vld [vmem:[%s332 + $0x24] sm:$0xf]
        %v343 = vld [vmem:[%s332 + $0x28] sm:$0xf]
        %v344 = vld [vmem:[%s332 + $0x2c] sm:$0xf]
        %v345 = vld [vmem:[%s332 + $0x30] sm:$0xf]
        %v346 = vld [vmem:[%s332 + $0x34] sm:$0xf]
        %v347 = vld [vmem:[%s332 + $0x38] sm:$0xf]
        %v348 = vld [vmem:[%s332 + $0x3c] sm:$0xf]
        %v365 = vunpack.c.l.b16 %v333
        %v366 = vunpack.c.l.b16 %v334
        %v367 = vunpack.c.l.b16 %v335
        %v368 = vunpack.c.l.b16 %v336
        %v369 = vunpack.c.l.b16 %v337
        %v370 = vunpack.c.l.b16 %v338
        %v371 = vunpack.c.l.b16 %v339
        %v372 = vunpack.c.l.b16 %v340
        %v373 = vunpack.c.l.b16 %v341
        %v374 = vunpack.c.l.b16 %v342
        %v375 = vunpack.c.l.b16 %v343
        %v376 = vunpack.c.l.b16 %v344
        %v377 = vunpack.c.l.b16 %v345
        %v378 = vunpack.c.l.b16 %v346
        %v379 = vunpack.c.l.b16 %v347
        %v380 = vunpack.c.l.b16 %v348
        %v381 = vpack.c.b16 %v366, %v365
        %v382 = vpack.c.b16 %v368, %v367
        %v383 = vpack.c.b16 %v370, %v369
        %v384 = vpack.c.b16 %v372, %v371
        %v385 = vpack.c.b16 %v374, %v373
        %v386 = vpack.c.b16 %v376, %v375
        %v387 = vpack.c.b16 %v378, %v377
        %v388 = vpack.c.b16 %v380, %v379
        %397 = vmatprep.subr.bf16.mxu0 0
        %398 = vmatpush1.bf16.msra.mxu0 %v381
        %399 = vmatprep.subr.bf16.mxu0 0
        %400 = vmatpush1.bf16.msra.mxu0 %v382
        %401 = vmatprep.subr.bf16.mxu0 0
        %402 = vmatpush1.bf16.msra.mxu0 %v383
        %403 = vmatprep.subr.bf16.mxu0 0
        %404 = vmatpush1.bf16.msra.mxu0 %v384
        %405 = vmatprep.subr.bf16.mxu0 0
        %406 = vmatpush1.bf16.msra.mxu0 %v385
        %407 = vmatprep.subr.bf16.mxu0 0
        %408 = vmatpush1.bf16.msra.mxu0 %v386
        %409 = vmatprep.subr.bf16.mxu0 0
        %410 = vmatpush1.bf16.msra.mxu0 %v387
        %411 = vmatprep.subr.bf16.mxu0 0
        %412 = vmatpush1.bf16.msra.mxu0 %v388
        %413 = vmatprep.subr.bf16.mxu0 0
        %414 = vmatpush1.bf16.msra.mxu0 0
        %415 = vmatprep.subr.bf16.mxu0 0
        %416 = vmatpush1.bf16.msra.mxu0 0
        %417 = vmatprep.subr.bf16.mxu0 0
        %418 = vmatpush1.bf16.msra.mxu0 0
        %419 = vmatprep.subr.bf16.mxu0 0
        %420 = vmatpush1.bf16.msra.mxu0 0
        %421 = vmatprep.subr.bf16.mxu0 0
        %422 = vmatpush1.bf16.msra.mxu0 0
        %423 = vmatprep.subr.bf16.mxu0 0
        %424 = vmatpush1.bf16.msra.mxu0 0
        %425 = vmatprep.subr.bf16.mxu0 0
        %426 = vmatpush1.bf16.msra.mxu0 0
        %427 = vmatprep.subr.bf16.mxu0 0
        %428 = vmatpush1.bf16.msra.mxu0 0
        %429 = vmatprep.mubr.bf16.mxu0 0
        %430 = vmatmul.mubr.bf16.gmra.mrb[0].mxu0 %v225
        %v431 = vpop.f32.mrb[0].mxu0
        %v432 = vadd.f32 0.0, %v431
        %v433 = vpop.f32.mrb[0].mxu0
        %v434 = vpop.f32.mrb[0].mxu0
        %v435 = vpop.f32.mrb[0].mxu0
        %436 = vdwg.mxu0
        %s437 = scalar_lea.vmem %s2, 4
        %v438 = vld [vmem:[%s437] sm:$0xf]
        %v439 = vpack.c.bf16 %v432, %v432
        %vm440 = vcmask 64512
        %v442 = vsel %vm440, %v438, 0
        %vm444 = vcmask 1043456
        %v446 = vsel %vm444, %v439, 0
        %448 = vmatprep.subr.bf16.mxu0 0
        %449 = vmatpush1.bf16.msra.mxu0 %v446
        %450 = vmatprep.subr.bf16.mxu0 0
        %451 = vmatpush1.bf16.msra.mxu0 0
        %452 = vmatprep.subr.bf16.mxu0 0
        %453 = vmatpush1.bf16.msra.mxu0 0
        %454 = vmatprep.subr.bf16.mxu0 0
        %455 = vmatpush1.bf16.msra.mxu0 0
        %456 = vmatprep.subr.bf16.mxu0 0
        %457 = vmatpush1.bf16.msra.mxu0 0
        %458 = vmatprep.subr.bf16.mxu0 0
        %459 = vmatpush1.bf16.msra.mxu0 0
        %460 = vmatprep.subr.bf16.mxu0 0
        %461 = vmatpush1.bf16.msra.mxu0 0
        %462 = vmatprep.subr.bf16.mxu0 0
        %463 = vmatpush1.bf16.msra.mxu0 0
        %464 = vmatprep.subr.bf16.mxu0 0
        %465 = vmatpush1.bf16.msra.mxu0 0
        %466 = vmatprep.subr.bf16.mxu0 0
        %467 = vmatpush1.bf16.msra.mxu0 0
        %468 = vmatprep.subr.bf16.mxu0 0
        %469 = vmatpush1.bf16.msra.mxu0 0
        %470 = vmatprep.subr.bf16.mxu0 0
        %471 = vmatpush1.bf16.msra.mxu0 0
        %472 = vmatprep.subr.bf16.mxu0 0
        %473 = vmatpush1.bf16.msra.mxu0 0
        %474 = vmatprep.subr.bf16.mxu0 0
        %475 = vmatpush1.bf16.msra.mxu0 0
        %476 = vmatprep.subr.bf16.mxu0 0
        %477 = vmatpush1.bf16.msra.mxu0 0
        %478 = vmatprep.subr.bf16.mxu0 0
        %479 = vmatpush1.bf16.msra.mxu0 0
        %480 = vmatprep.mubr.bf16.mxu0 0
        %481 = vmatmul.mubr.bf16.gmra.mrb[0].mxu0 %v442
        %v482 = vpop.f32.mrb[0].mxu0
        %v483 = vadd.f32 0.0, %v482
        %v484 = vpop.f32.mrb[0].mxu0
        %v485 = vpop.f32.mrb[0].mxu0
        %v486 = vpop.f32.mrb[0].mxu0
        %487 = vdwg.mxu0
        %v489 = vsel %vm440, %v330, 0
        %v492 = vsel %vm444, %v331, 0
        %494 = vmatprep.subr.bf16.mxu0 0
        %495 = vmatpush1.bf16.msra.mxu0 %v492
        %496 = vmatprep.subr.bf16.mxu0 0
        %497 = vmatpush1.bf16.msra.mxu0 0
        %498 = vmatprep.subr.bf16.mxu0 0
        %499 = vmatpush1.bf16.msra.mxu0 0
        %500 = vmatprep.subr.bf16.mxu0 0
        %501 = vmatpush1.bf16.msra.mxu0 0
        %502 = vmatprep.subr.bf16.mxu0 0
        %503 = vmatpush1.bf16.msra.mxu0 0
        %504 = vmatprep.subr.bf16.mxu0 0
        %505 = vmatpush1.bf16.msra.mxu0 0
        %506 = vmatprep.subr.bf16.mxu0 0
        %507 = vmatpush1.bf16.msra.mxu0 0
        %508 = vmatprep.subr.bf16.mxu0 0
        %509 = vmatpush1.bf16.msra.mxu0 0
        %510 = vmatprep.subr.bf16.mxu0 0
        %511 = vmatpush1.bf16.msra.mxu0 0
        %512 = vmatprep.subr.bf16.mxu0 0
        %513 = vmatpush1.bf16.msra.mxu0 0
        %514 = vmatprep.subr.bf16.mxu0 0
        %515 = vmatpush1.bf16.msra.mxu0 0
        %516 = vmatprep.subr.bf16.mxu0 0
        %517 = vmatpush1.bf16.msra.mxu0 0
        %518 = vmatprep.subr.bf16.mxu0 0
        %519 = vmatpush1.bf16.msra.mxu0 0
        %520 = vmatprep.subr.bf16.mxu0 0
        %521 = vmatpush1.bf16.msra.mxu0 0
        %522 = vmatprep.subr.bf16.mxu0 0
        %523 = vmatpush1.bf16.msra.mxu0 0
        %524 = vmatprep.subr.bf16.mxu0 0
        %525 = vmatpush1.bf16.msra.mxu0 0
        %526 = vmatprep.mubr.bf16.mxu0 0
        %527 = vmatmul.mubr.bf16.gmra.mrb[0].mxu0 %v489
        %v528 = vpop.f32.mrb[0].mxu0
        %v529 = vadd.f32 %v483, %v528
        %v530 = vpop.f32.mrb[0].mxu0
        %v531 = vpop.f32.mrb[0].mxu0
        %v532 = vpop.f32.mrb[0].mxu0
        %533 = vdwg.mxu0
        %s534 = scalar_lea.vmem %s223, 128
        %v535 = vld [vmem:[%s534] sm:$0xf]
        %v536 = vld [vmem:[%s534 + $0x4] sm:$0xf]
        %v537 = vld [vmem:[%s534 + $0x8] sm:$0xf]
        %v538 = vld [vmem:[%s534 + $0xc] sm:$0xf]
        %v539 = vld [vmem:[%s534 + $0x10] sm:$0xf]
        %v540 = vld [vmem:[%s534 + $0x14] sm:$0xf]
        %v541 = vld [vmem:[%s534 + $0x18] sm:$0xf]
        %v542 = vld [vmem:[%s534 + $0x1c] sm:$0xf]
        %v543 = vld [vmem:[%s534 + $0x20] sm:$0xf]
        %v544 = vld [vmem:[%s534 + $0x24] sm:$0xf]
        %v545 = vld [vmem:[%s534 + $0x28] sm:$0xf]
        %v546 = vld [vmem:[%s534 + $0x2c] sm:$0xf]
        %v547 = vld [vmem:[%s534 + $0x30] sm:$0xf]
        %v548 = vld [vmem:[%s534 + $0x34] sm:$0xf]
        %v549 = vld [vmem:[%s534 + $0x38] sm:$0xf]
        %v550 = vld [vmem:[%s534 + $0x3c] sm:$0xf]
        %v567 = vunpack.c.l.b16 %v535
        %v568 = vunpack.c.l.b16 %v536
        %v569 = vunpack.c.l.b16 %v537
        %v570 = vunpack.c.l.b16 %v538
        %v571 = vunpack.c.l.b16 %v539
        %v572 = vunpack.c.l.b16 %v540
        %v573 = vunpack.c.l.b16 %v541
        %v574 = vunpack.c.l.b16 %v542
        %v575 = vunpack.c.l.b16 %v543
        %v576 = vunpack.c.l.b16 %v544
        %v577 = vunpack.c.l.b16 %v545
        %v578 = vunpack.c.l.b16 %v546
        %v579 = vunpack.c.l.b16 %v547
        %v580 = vunpack.c.l.b16 %v548
        %v581 = vunpack.c.l.b16 %v549
        %v582 = vunpack.c.l.b16 %v550
        %v583 = vpack.c.b16 %v568, %v567
        %v584 = vpack.c.b16 %v570, %v569
        %v585 = vpack.c.b16 %v572, %v571
        %v586 = vpack.c.b16 %v574, %v573
        %v587 = vpack.c.b16 %v576, %v575
        %v588 = vpack.c.b16 %v578, %v577
        %v589 = vpack.c.b16 %v580, %v579
        %v590 = vpack.c.b16 %v582, %v581
        %599 = vmatprep.subr.bf16.mxu0 0
        %600 = vmatpush1.bf16.msra.mxu0 %v583
        %601 = vmatprep.subr.bf16.mxu0 0
        %602 = vmatpush1.bf16.msra.mxu0 %v584
        %603 = vmatprep.subr.bf16.mxu0 0
        %604 = vmatpush1.bf16.msra.mxu0 %v585
        %605 = vmatprep.subr.bf16.mxu0 0
        %606 = vmatpush1.bf16.msra.mxu0 %v586
        %607 = vmatprep.subr.bf16.mxu0 0
        %608 = vmatpush1.bf16.msra.mxu0 %v587
        %609 = vmatprep.subr.bf16.mxu0 0
        %610 = vmatpush1.bf16.msra.mxu0 %v588
        %611 = vmatprep.subr.bf16.mxu0 0
        %612 = vmatpush1.bf16.msra.mxu0 %v589
        %613 = vmatprep.subr.bf16.mxu0 0
        %614 = vmatpush1.bf16.msra.mxu0 %v590
        %615 = vmatprep.subr.bf16.mxu0 0
        %616 = vmatpush1.bf16.msra.mxu0 0
        %617 = vmatprep.subr.bf16.mxu0 0
        %618 = vmatpush1.bf16.msra.mxu0 0
        %619 = vmatprep.subr.bf16.mxu0 0
        %620 = vmatpush1.bf16.msra.mxu0 0
        %621 = vmatprep.subr.bf16.mxu0 0
        %622 = vmatpush1.bf16.msra.mxu0 0
        %623 = vmatprep.subr.bf16.mxu0 0
        %624 = vmatpush1.bf16.msra.mxu0 0
        %625 = vmatprep.subr.bf16.mxu0 0
        %626 = vmatpush1.bf16.msra.mxu0 0
        %627 = vmatprep.subr.bf16.mxu0 0
        %628 = vmatpush1.bf16.msra.mxu0 0
        %629 = vmatprep.subr.bf16.mxu0 0
        %630 = vmatpush1.bf16.msra.mxu0 0
        %631 = vmatprep.mubr.bf16.mxu0 0
        %632 = vmatmul.mubr.bf16.gmra.mrb[0].mxu0 %v225
        %v633 = vpop.f32.mrb[0].mxu0
        %v634 = vadd.f32 0.0, %v633
        %v635 = vpop.f32.mrb[0].mxu0
        %v636 = vpop.f32.mrb[0].mxu0
        %v637 = vpop.f32.mrb[0].mxu0
        %638 = vdwg.mxu0
        %s639 = scalar_lea.vmem %s2, 8
        %v640 = vld [vmem:[%s639] sm:$0xf]
        %v641 = vpack.c.bf16 %v634, %v634
        %v643 = vsel %vm440, %v640, 0
        %v646 = vsel %vm444, %v641, 0
        %648 = vmatprep.subr.bf16.mxu0 0
        %649 = vmatpush1.bf16.msra.mxu0 %v646
        %650 = vmatprep.subr.bf16.mxu0 0
        %651 = vmatpush1.bf16.msra.mxu0 0
        %652 = vmatprep.subr.bf16.mxu0 0
        %653 = vmatpush1.bf16.msra.mxu0 0
        %654 = vmatprep.subr.bf16.mxu0 0
        %655 = vmatpush1.bf16.msra.mxu0 0
        %656 = vmatprep.subr.bf16.mxu0 0
        %657 = vmatpush1.bf16.msra.mxu0 0
        %658 = vmatprep.subr.bf16.mxu0 0
        %659 = vmatpush1.bf16.msra.mxu0 0
        %660 = vmatprep.subr.bf16.mxu0 0
        %661 = vmatpush1.bf16.msra.mxu0 0
        %662 = vmatprep.subr.bf16.mxu0 0
        %663 = vmatpush1.bf16.msra.mxu0 0
        %664 = vmatprep.subr.bf16.mxu0 0
        %665 = vmatpush1.bf16.msra.mxu0 0
        %666 = vmatprep.subr.bf16.mxu0 0
        %667 = vmatpush1.bf16.msra.mxu0 0
        %668 = vmatprep.subr.bf16.mxu0 0
        %669 = vmatpush1.bf16.msra.mxu0 0
        %670 = vmatprep.subr.bf16.mxu0 0
        %671 = vmatpush1.bf16.msra.mxu0 0
        %672 = vmatprep.subr.bf16.mxu0 0
        %673 = vmatpush1.bf16.msra.mxu0 0
        %674 = vmatprep.subr.bf16.mxu0 0
        %675 = vmatpush1.bf16.msra.mxu0 0
        %676 = vmatprep.subr.bf16.mxu0 0
        %677 = vmatpush1.bf16.msra.mxu0 0
        %678 = vmatprep.subr.bf16.mxu0 0
        %679 = vmatpush1.bf16.msra.mxu0 0
        %680 = vmatprep.mubr.bf16.mxu0 0
        %681 = vmatmul.mubr.bf16.gmra.mrb[0].mxu0 %v643
        %v682 = vpop.f32.mrb[0].mxu0
        %v683 = vadd.f32 0.0, %v682
        %v684 = vpop.f32.mrb[0].mxu0
        %v685 = vpop.f32.mrb[0].mxu0
        %v686 = vpop.f32.mrb[0].mxu0
        %687 = vdwg.mxu0
        %v688 = vadd.f32 %v529, %v683
        %s689 = scalar_lea.vmem %s223, 192
        %v690 = vld [vmem:[%s689] sm:$0xf]
        %v691 = vld [vmem:[%s689 + $0x4] sm:$0xf]
        %v692 = vld [vmem:[%s689 + $0x8] sm:$0xf]
        %v693 = vld [vmem:[%s689 + $0xc] sm:$0xf]
        %v694 = vld [vmem:[%s689 + $0x10] sm:$0xf]
        %v695 = vld [vmem:[%s689 + $0x14] sm:$0xf]
        %v696 = vld [vmem:[%s689 + $0x18] sm:$0xf]
        %v697 = vld [vmem:[%s689 + $0x1c] sm:$0xf]
        %v698 = vld [vmem:[%s689 + $0x20] sm:$0xf]
        %v699 = vld [vmem:[%s689 + $0x24] sm:$0xf]
        %v700 = vld [vmem:[%s689 + $0x28] sm:$0xf]
        %v701 = vld [vmem:[%s689 + $0x2c] sm:$0xf]
        %v702 = vld [vmem:[%s689 + $0x30] sm:$0xf]
        %v703 = vld [vmem:[%s689 + $0x34] sm:$0xf]
        %v704 = vld [vmem:[%s689 + $0x38] sm:$0xf]
        %v705 = vld [vmem:[%s689 + $0x3c] sm:$0xf]
        %v722 = vunpack.c.l.b16 %v690
        %v723 = vunpack.c.l.b16 %v691
        %v724 = vunpack.c.l.b16 %v692
        %v725 = vunpack.c.l.b16 %v693
        %v726 = vunpack.c.l.b16 %v694
        %v727 = vunpack.c.l.b16 %v695
        %v728 = vunpack.c.l.b16 %v696
        %v729 = vunpack.c.l.b16 %v697
        %v730 = vunpack.c.l.b16 %v698
        %v731 = vunpack.c.l.b16 %v699
        %v732 = vunpack.c.l.b16 %v700
        %v733 = vunpack.c.l.b16 %v701
        %v734 = vunpack.c.l.b16 %v702
        %v735 = vunpack.c.l.b16 %v703
        %v736 = vunpack.c.l.b16 %v704
        %v737 = vunpack.c.l.b16 %v705
        %v738 = vpack.c.b16 %v723, %v722
        %v739 = vpack.c.b16 %v725, %v724
        %v740 = vpack.c.b16 %v727, %v726
        %v741 = vpack.c.b16 %v729, %v728
        %v742 = vpack.c.b16 %v731, %v730
        %v743 = vpack.c.b16 %v733, %v732
        %v744 = vpack.c.b16 %v735, %v734
        %v745 = vpack.c.b16 %v737, %v736
        %754 = vmatprep.subr.bf16.mxu0 0
        %755 = vmatpush1.bf16.msra.mxu0 %v738
        %756 = vmatprep.subr.bf16.mxu0 0
        %757 = vmatpush1.bf16.msra.mxu0 %v739
        %758 = vmatprep.subr.bf16.mxu0 0
        %759 = vmatpush1.bf16.msra.mxu0 %v740
        %760 = vmatprep.subr.bf16.mxu0 0
        %761 = vmatpush1.bf16.msra.mxu0 %v741
        %762 = vmatprep.subr.bf16.mxu0 0
        %763 = vmatpush1.bf16.msra.mxu0 %v742
        %764 = vmatprep.subr.bf16.mxu0 0
        %765 = vmatpush1.bf16.msra.mxu0 %v743
        %766 = vmatprep.subr.bf16.mxu0 0
        %767 = vmatpush1.bf16.msra.mxu0 %v744
        %768 = vmatprep.subr.bf16.mxu0 0
        %769 = vmatpush1.bf16.msra.mxu0 %v745
        %770 = vmatprep.subr.bf16.mxu0 0
        %771 = vmatpush1.bf16.msra.mxu0 0
        %772 = vmatprep.subr.bf16.mxu0 0
        %773 = vmatpush1.bf16.msra.mxu0 0
        %774 = vmatprep.subr.bf16.mxu0 0
        %775 = vmatpush1.bf16.msra.mxu0 0
        %776 = vmatprep.subr.bf16.mxu0 0
        %777 = vmatpush1.bf16.msra.mxu0 0
        %778 = vmatprep.subr.bf16.mxu0 0
        %779 = vmatpush1.bf16.msra.mxu0 0
        %780 = vmatprep.subr.bf16.mxu0 0
        %781 = vmatpush1.bf16.msra.mxu0 0
        %782 = vmatprep.subr.bf16.mxu0 0
        %783 = vmatpush1.bf16.msra.mxu0 0
        %784 = vmatprep.subr.bf16.mxu0 0
        %785 = vmatpush1.bf16.msra.mxu0 0
        %786 = vmatprep.mubr.bf16.mxu0 0
        %787 = vmatmul.mubr.bf16.gmra.mrb[0].mxu0 %v225
        %v788 = vpop.f32.mrb[0].mxu0
        %v789 = vadd.f32 0.0, %v788
        %v790 = vpop.f32.mrb[0].mxu0
        %v791 = vpop.f32.mrb[0].mxu0
        %v792 = vpop.f32.mrb[0].mxu0
        %793 = vdwg.mxu0
        %s794 = scalar_lea.vmem %s2, 12
        %v795 = vld [vmem:[%s794] sm:$0xf]
        %v796 = vpack.c.bf16 %v789, %v789
        %v798 = vsel %vm440, %v795, 0
        %v801 = vsel %vm444, %v796, 0
        %803 = vmatprep.subr.bf16.mxu0 0
        %804 = vmatpush1.bf16.msra.mxu0 %v801
        %805 = vmatprep.subr.bf16.mxu0 0
        %806 = vmatpush1.bf16.msra.mxu0 0
        %807 = vmatprep.subr.bf16.mxu0 0
        %808 = vmatpush1.bf16.msra.mxu0 0
        %809 = vmatprep.subr.bf16.mxu0 0
        %810 = vmatpush1.bf16.msra.mxu0 0
        %811 = vmatprep.subr.bf16.mxu0 0
        %812 = vmatpush1.bf16.msra.mxu0 0
        %813 = vmatprep.subr.bf16.mxu0 0
        %814 = vmatpush1.bf16.msra.mxu0 0
        %815 = vmatprep.subr.bf16.mxu0 0
        %816 = vmatpush1.bf16.msra.mxu0 0
        %817 = vmatprep.subr.bf16.mxu0 0
        %818 = vmatpush1.bf16.msra.mxu0 0
        %819 = vmatprep.subr.bf16.mxu0 0
        %820 = vmatpush1.bf16.msra.mxu0 0
        %821 = vmatprep.subr.bf16.mxu0 0
        %822 = vmatpush1.bf16.msra.mxu0 0
        %823 = vmatprep.subr.bf16.mxu0 0
        %824 = vmatpush1.bf16.msra.mxu0 0
        %825 = vmatprep.subr.bf16.mxu0 0
        %826 = vmatpush1.bf16.msra.mxu0 0
        %827 = vmatprep.subr.bf16.mxu0 0
        %828 = vmatpush1.bf16.msra.mxu0 0
        %829 = vmatprep.subr.bf16.mxu0 0
        %830 = vmatpush1.bf16.msra.mxu0 0
        %831 = vmatprep.subr.bf16.mxu0 0
        %832 = vmatpush1.bf16.msra.mxu0 0
        %833 = vmatprep.subr.bf16.mxu0 0
        %834 = vmatpush1.bf16.msra.mxu0 0
        %835 = vmatprep.mubr.bf16.mxu0 0
        %836 = vmatmul.mubr.bf16.gmra.mrb[0].mxu0 %v798
        %v837 = vpop.f32.mrb[0].mxu0
        %v838 = vadd.f32 0.0, %v837
        %v839 = vpop.f32.mrb[0].mxu0
        %v840 = vpop.f32.mrb[0].mxu0
        %v841 = vpop.f32.mrb[0].mxu0
        %842 = vdwg.mxu0
        %v843 = vadd.f32 %v688, %v838
        %s844 = scalar_lea.vmem %s223, 256
        %v845 = vld [vmem:[%s844] sm:$0xf]
        %v846 = vld [vmem:[%s844 + $0x4] sm:$0xf]
        %v847 = vld [vmem:[%s844 + $0x8] sm:$0xf]
        %v848 = vld [vmem:[%s844 + $0xc] sm:$0xf]
        %v849 = vld [vmem:[%s844 + $0x10] sm:$0xf]
        %v850 = vld [vmem:[%s844 + $0x14] sm:$0xf]
        %v851 = vld [vmem:[%s844 + $0x18] sm:$0xf]
        %v852 = vld [vmem:[%s844 + $0x1c] sm:$0xf]
        %v853 = vld [vmem:[%s844 + $0x20] sm:$0xf]
        %v854 = vld [vmem:[%s844 + $0x24] sm:$0xf]
        %v855 = vld [vmem:[%s844 + $0x28] sm:$0xf]
        %v856 = vld [vmem:[%s844 + $0x2c] sm:$0xf]
        %v857 = vld [vmem:[%s844 + $0x30] sm:$0xf]
        %v858 = vld [vmem:[%s844 + $0x34] sm:$0xf]
        %v859 = vld [vmem:[%s844 + $0x38] sm:$0xf]
        %v860 = vld [vmem:[%s844 + $0x3c] sm:$0xf]
        %v877 = vunpack.c.l.b16 %v845
        %v878 = vunpack.c.l.b16 %v846
        %v879 = vunpack.c.l.b16 %v847
        %v880 = vunpack.c.l.b16 %v848
        %v881 = vunpack.c.l.b16 %v849
        %v882 = vunpack.c.l.b16 %v850
        %v883 = vunpack.c.l.b16 %v851
        %v884 = vunpack.c.l.b16 %v852
        %v885 = vunpack.c.l.b16 %v853
        %v886 = vunpack.c.l.b16 %v854
        %v887 = vunpack.c.l.b16 %v855
        %v888 = vunpack.c.l.b16 %v856
        %v889 = vunpack.c.l.b16 %v857
        %v890 = vunpack.c.l.b16 %v858
        %v891 = vunpack.c.l.b16 %v859
        %v892 = vunpack.c.l.b16 %v860
        %v893 = vpack.c.b16 %v878, %v877
        %v894 = vpack.c.b16 %v880, %v879
        %v895 = vpack.c.b16 %v882, %v881
        %v896 = vpack.c.b16 %v884, %v883
        %v897 = vpack.c.b16 %v886, %v885
        %v898 = vpack.c.b16 %v888, %v887
        %v899 = vpack.c.b16 %v890, %v889
        %v900 = vpack.c.b16 %v892, %v891
        %909 = vmatprep.subr.bf16.mxu0 0
        %910 = vmatpush1.bf16.msra.mxu0 %v893
        %911 = vmatprep.subr.bf16.mxu0 0
        %912 = vmatpush1.bf16.msra.mxu0 %v894
        %913 = vmatprep.subr.bf16.mxu0 0
        %914 = vmatpush1.bf16.msra.mxu0 %v895
        %915 = vmatprep.subr.bf16.mxu0 0
        %916 = vmatpush1.bf16.msra.mxu0 %v896
        %917 = vmatprep.subr.bf16.mxu0 0
        %918 = vmatpush1.bf16.msra.mxu0 %v897
        %919 = vmatprep.subr.bf16.mxu0 0
        %920 = vmatpush1.bf16.msra.mxu0 %v898
        %921 = vmatprep.subr.bf16.mxu0 0
        %922 = vmatpush1.bf16.msra.mxu0 %v899
        %923 = vmatprep.subr.bf16.mxu0 0
        %924 = vmatpush1.bf16.msra.mxu0 %v900
        %925 = vmatprep.subr.bf16.mxu0 0
        %926 = vmatpush1.bf16.msra.mxu0 0
        %927 = vmatprep.subr.bf16.mxu0 0
        %928 = vmatpush1.bf16.msra.mxu0 0
        %929 = vmatprep.subr.bf16.mxu0 0
        %930 = vmatpush1.bf16.msra.mxu0 0
        %931 = vmatprep.subr.bf16.mxu0 0
        %932 = vmatpush1.bf16.msra.mxu0 0
        %933 = vmatprep.subr.bf16.mxu0 0
        %934 = vmatpush1.bf16.msra.mxu0 0
        %935 = vmatprep.subr.bf16.mxu0 0
        %936 = vmatpush1.bf16.msra.mxu0 0
        %937 = vmatprep.subr.bf16.mxu0 0
        %938 = vmatpush1.bf16.msra.mxu0 0
        %939 = vmatprep.subr.bf16.mxu0 0
        %940 = vmatpush1.bf16.msra.mxu0 0
        %941 = vmatprep.mubr.bf16.mxu0 0
        %942 = vmatmul.mubr.bf16.gmra.mrb[0].mxu0 %v225
        %v943 = vpop.f32.mrb[0].mxu0
        %v944 = vadd.f32 0.0, %v943
        %v945 = vpop.f32.mrb[0].mxu0
        %v946 = vpop.f32.mrb[0].mxu0
        %v947 = vpop.f32.mrb[0].mxu0
        %948 = vdwg.mxu0
        %s949 = scalar_lea.vmem %s2, 16
        %v950 = vld [vmem:[%s949] sm:$0xf]
        %v951 = vpack.c.bf16 %v944, %v944
        %v953 = vsel %vm440, %v950, 0
        %v956 = vsel %vm444, %v951, 0
        %958 = vmatprep.subr.bf16.mxu0 0
        %959 = vmatpush1.bf16.msra.mxu0 %v956
        %960 = vmatprep.subr.bf16.mxu0 0
        %961 = vmatpush1.bf16.msra.mxu0 0
        %962 = vmatprep.subr.bf16.mxu0 0
        %963 = vmatpush1.bf16.msra.mxu0 0
        %964 = vmatprep.subr.bf16.mxu0 0
        %965 = vmatpush1.bf16.msra.mxu0 0
        %966 = vmatprep.subr.bf16.mxu0 0
        %967 = vmatpush1.bf16.msra.mxu0 0
        %968 = vmatprep.subr.bf16.mxu0 0
        %969 = vmatpush1.bf16.msra.mxu0 0
        %970 = vmatprep.subr.bf16.mxu0 0
        %971 = vmatpush1.bf16.msra.mxu0 0
        %972 = vmatprep.subr.bf16.mxu0 0
        %973 = vmatpush1.bf16.msra.mxu0 0
        %974 = vmatprep.subr.bf16.mxu0 0
        %975 = vmatpush1.bf16.msra.mxu0 0
        %976 = vmatprep.subr.bf16.mxu0 0
        %977 = vmatpush1.bf16.msra.mxu0 0
        %978 = vmatprep.subr.bf16.mxu0 0
        %979 = vmatpush1.bf16.msra.mxu0 0
        %980 = vmatprep.subr.bf16.mxu0 0
        %981 = vmatpush1.bf16.msra.mxu0 0
        %982 = vmatprep.subr.bf16.mxu0 0
        %983 = vmatpush1.bf16.msra.mxu0 0
        %984 = vmatprep.subr.bf16.mxu0 0
        %985 = vmatpush1.bf16.msra.mxu0 0
        %986 = vmatprep.subr.bf16.mxu0 0
        %987 = vmatpush1.bf16.msra.mxu0 0
        %988 = vmatprep.subr.bf16.mxu0 0
        %989 = vmatpush1.bf16.msra.mxu0 0
        %990 = vmatprep.mubr.bf16.mxu0 0
        %991 = vmatmul.mubr.bf16.gmra.mrb[0].mxu0 %v953
        %v992 = vpop.f32.mrb[0].mxu0
        %v993 = vadd.f32 0.0, %v992
        %v994 = vpop.f32.mrb[0].mxu0
        %v995 = vpop.f32.mrb[0].mxu0
        %v996 = vpop.f32.mrb[0].mxu0
        %997 = vdwg.mxu0
        %v998 = vadd.f32 %v843, %v993
        %s999 = scalar_lea.vmem %s223, 320
        %v1000 = vld [vmem:[%s999] sm:$0xf]
        %v1001 = vld [vmem:[%s999 + $0x4] sm:$0xf]
        %v1002 = vld [vmem:[%s999 + $0x8] sm:$0xf]
        %v1003 = vld [vmem:[%s999 + $0xc] sm:$0xf]
        %v1004 = vld [vmem:[%s999 + $0x10] sm:$0xf]
        %v1005 = vld [vmem:[%s999 + $0x14] sm:$0xf]
        %v1006 = vld [vmem:[%s999 + $0x18] sm:$0xf]
        %v1007 = vld [vmem:[%s999 + $0x1c] sm:$0xf]
        %v1008 = vld [vmem:[%s999 + $0x20] sm:$0xf]
        %v1009 = vld [vmem:[%s999 + $0x24] sm:$0xf]
        %v1010 = vld [vmem:[%s999 + $0x28] sm:$0xf]
        %v1011 = vld [vmem:[%s999 + $0x2c] sm:$0xf]
        %v1012 = vld [vmem:[%s999 + $0x30] sm:$0xf]
        %v1013 = vld [vmem:[%s999 + $0x34] sm:$0xf]
        %v1014 = vld [vmem:[%s999 + $0x38] sm:$0xf]
        %v1015 = vld [vmem:[%s999 + $0x3c] sm:$0xf]
        %v1032 = vunpack.c.l.b16 %v1000
        %v1033 = vunpack.c.l.b16 %v1001
        %v1034 = vunpack.c.l.b16 %v1002
        %v1035 = vunpack.c.l.b16 %v1003
        %v1036 = vunpack.c.l.b16 %v1004
        %v1037 = vunpack.c.l.b16 %v1005
        %v1038 = vunpack.c.l.b16 %v1006
        %v1039 = vunpack.c.l.b16 %v1007
        %v1040 = vunpack.c.l.b16 %v1008
        %v1041 = vunpack.c.l.b16 %v1009
        %v1042 = vunpack.c.l.b16 %v1010
        %v1043 = vunpack.c.l.b16 %v1011
        %v1044 = vunpack.c.l.b16 %v1012
        %v1045 = vunpack.c.l.b16 %v1013
        %v1046 = vunpack.c.l.b16 %v1014
        %v1047 = vunpack.c.l.b16 %v1015
        %v1048 = vpack.c.b16 %v1033, %v1032
        %v1049 = vpack.c.b16 %v1035, %v1034
        %v1050 = vpack.c.b16 %v1037, %v1036
        %v1051 = vpack.c.b16 %v1039, %v1038
        %v1052 = vpack.c.b16 %v1041, %v1040
        %v1053 = vpack.c.b16 %v1043, %v1042
        %v1054 = vpack.c.b16 %v1045, %v1044
        %v1055 = vpack.c.b16 %v1047, %v1046
        %1064 = vmatprep.subr.bf16.mxu0 0
        %1065 = vmatpush1.bf16.msra.mxu0 %v1048
        %1066 = vmatprep.subr.bf16.mxu0 0
        %1067 = vmatpush1.bf16.msra.mxu0 %v1049
        %1068 = vmatprep.subr.bf16.mxu0 0
        %1069 = vmatpush1.bf16.msra.mxu0 %v1050
        %1070 = vmatprep.subr.bf16.mxu0 0
        %1071 = vmatpush1.bf16.msra.mxu0 %v1051
        %1072 = vmatprep.subr.bf16.mxu0 0
        %1073 = vmatpush1.bf16.msra.mxu0 %v1052
        %1074 = vmatprep.subr.bf16.mxu0 0
        %1075 = vmatpush1.bf16.msra.mxu0 %v1053
        %1076 = vmatprep.subr.bf16.mxu0 0
        %1077 = vmatpush1.bf16.msra.mxu0 %v1054
        %1078 = vmatprep.subr.bf16.mxu0 0
        %1079 = vmatpush1.bf16.msra.mxu0 %v1055
        %1080 = vmatprep.subr.bf16.mxu0 0
        %1081 = vmatpush1.bf16.msra.mxu0 0
        %1082 = vmatprep.subr.bf16.mxu0 0
        %1083 = vmatpush1.bf16.msra.mxu0 0
        %1084 = vmatprep.subr.bf16.mxu0 0
        %1085 = vmatpush1.bf16.msra.mxu0 0
        %1086 = vmatprep.subr.bf16.mxu0 0
        %1087 = vmatpush1.bf16.msra.mxu0 0
        %1088 = vmatprep.subr.bf16.mxu0 0
        %1089 = vmatpush1.bf16.msra.mxu0 0
        %1090 = vmatprep.subr.bf16.mxu0 0
        %1091 = vmatpush1.bf16.msra.mxu0 0
        %1092 = vmatprep.subr.bf16.mxu0 0
        %1093 = vmatpush1.bf16.msra.mxu0 0
        %1094 = vmatprep.subr.bf16.mxu0 0
        %1095 = vmatpush1.bf16.msra.mxu0 0
        %1096 = vmatprep.mubr.bf16.mxu0 0
        %1097 = vmatmul.mubr.bf16.gmra.mrb[0].mxu0 %v225
        %v1098 = vpop.f32.mrb[0].mxu0
        %v1099 = vadd.f32 0.0, %v1098
        %v1100 = vpop.f32.mrb[0].mxu0
        %v1101 = vpop.f32.mrb[0].mxu0
        %v1102 = vpop.f32.mrb[0].mxu0
        %1103 = vdwg.mxu0
        %s1104 = scalar_lea.vmem %s2, 20
        %v1105 = vld [vmem:[%s1104] sm:$0xf]
        %v1106 = vpack.c.bf16 %v1099, %v1099
        %v1108 = vsel %vm440, %v1105, 0
        %v1111 = vsel %vm444, %v1106, 0
        %1113 = vmatprep.subr.bf16.mxu0 0
        %1114 = vmatpush1.bf16.msra.mxu0 %v1111
        %1115 = vmatprep.subr.bf16.mxu0 0
        %1116 = vmatpush1.bf16.msra.mxu0 0
        %1117 = vmatprep.subr.bf16.mxu0 0
        %1118 = vmatpush1.bf16.msra.mxu0 0
        %1119 = vmatprep.subr.bf16.mxu0 0
        %1120 = vmatpush1.bf16.msra.mxu0 0
        %1121 = vmatprep.subr.bf16.mxu0 0
        %1122 = vmatpush1.bf16.msra.mxu0 0
        %1123 = vmatprep.subr.bf16.mxu0 0
        %1124 = vmatpush1.bf16.msra.mxu0 0
        %1125 = vmatprep.subr.bf16.mxu0 0
        %1126 = vmatpush1.bf16.msra.mxu0 0
        %1127 = vmatprep.subr.bf16.mxu0 0
        %1128 = vmatpush1.bf16.msra.mxu0 0
        %1129 = vmatprep.subr.bf16.mxu0 0
        %1130 = vmatpush1.bf16.msra.mxu0 0
        %1131 = vmatprep.subr.bf16.mxu0 0
        %1132 = vmatpush1.bf16.msra.mxu0 0
        %1133 = vmatprep.subr.bf16.mxu0 0
        %1134 = vmatpush1.bf16.msra.mxu0 0
        %1135 = vmatprep.subr.bf16.mxu0 0
        %1136 = vmatpush1.bf16.msra.mxu0 0
        %1137 = vmatprep.subr.bf16.mxu0 0
        %1138 = vmatpush1.bf16.msra.mxu0 0
        %1139 = vmatprep.subr.bf16.mxu0 0
        %1140 = vmatpush1.bf16.msra.mxu0 0
        %1141 = vmatprep.subr.bf16.mxu0 0
        %1142 = vmatpush1.bf16.msra.mxu0 0
        %1143 = vmatprep.subr.bf16.mxu0 0
        %1144 = vmatpush1.bf16.msra.mxu0 0
        %1145 = vmatprep.mubr.bf16.mxu0 0
        %1146 = vmatmul.mubr.bf16.gmra.mrb[0].mxu0 %v1108
        %v1147 = vpop.f32.mrb[0].mxu0
        %v1148 = vadd.f32 0.0, %v1147
        %v1149 = vpop.f32.mrb[0].mxu0
        %v1150 = vpop.f32.mrb[0].mxu0
        %v1151 = vpop.f32.mrb[0].mxu0
        %1152 = vdwg.mxu0
        %v1153 = vadd.f32 %v998, %v1148
        %v1154 = vld [vmem:[%s3] sm:$0xff]
        %1156 = vset.pattern.permute.xlu0 0
        %1157 = vperm.xlu0 %1156, %v1154
        %v1158 = vpop.permute.xlu0 %1157
        %v1160 = vadd.f32 %v1153, %v1158
        %1161 = vst [vmem:[%s215] sm:$0xff] %v1160
        %s1162 = sand.u32 %s134, 1
        %s1163 = scalar_lea.sflag [#allocation3], %s1162
        %s1164 = sand.u32 %s134, 1
        %s1165 = smul.addr %s1164, 8
        %s1166 = scalar_lea.vmem [#allocation2], %s1165
        // Predicated region
        $region37: #{conv_forward.1} parent=35 // pred_check
          %p1167 = pneg %p144
        $region38: #{conv_forward.1} parent=35 // pred_check_branch
          %1169 = sbr.rel (%p1167) target = $region40
        $region39: #{conv_forward.1} parent=35 // pred_region
          %s1171 = ssub.s32 128, 128
          %1172 = vsyncadd %s1163, %s1171
          %s1173 = sadd.s32 %s22, %s23
          %s1174 = smul.addr %s1173, 128
          %s1175 = scalar_lea.hbm %s4, %s1174
          %s1177 = sshll.u32 %s1166, 4
          %s1178 = int_to_ptr.vmem [resolvable:$true] %s1177
          %1180 = dma.vmem_to_hbm [thread:$0]  %s1178, 128, %s1175, %s1163
        $region40: #{conv_forward.1} parent=35 // pred_fallthru
          _
      $region36: #{conv_forward.1} parent=5 // pred_fallthru
        _
      %p1181 = scmp.le.s32.totalorder 2, %s13
      // Predicated region
      $region41: #{conv_forward.1} parent=5 // pred_check
        %p1182 = pneg %p1181
      $region42: #{conv_forward.1} parent=5 // pred_check_branch
        %1184 = sbr.rel (%p1182) target = $region44
      $region43: #{conv_forward.1} parent=5 // pred_region
        %s1185 = ssub.s32 %s13, 2
        // Predicated region
        $region45: #{conv_forward.1} parent=43 // pred_check
          %p1186 = pneg %p150
        $region46: #{conv_forward.1} parent=43 // pred_check_branch
          %1188 = sbr.rel (%p1186) target = $region48
        $region47: #{conv_forward.1} parent=43 // pred_region
          %s1189 = sand.u32 %s135, 1
          %s1190 = scalar_lea.sflag [#allocation3], %s1189
          %s1191 = sand.u32 %s135, 1
          %s1192 = smul.addr %s1191, 8
          %s1193 = scalar_lea.vmem [#allocation2], %s1192
          %1194 = dma.done %s1190, 128
        $region48: #{conv_forward.1} parent=43 // pred_fallthru
          _
      $region44: #{conv_forward.1} parent=5 // pred_fallthru
        _
    $region6: #{conv_forward.1} parent=1 // loop_footer
      %s17 = sadd.s32 1, %s13
    $region7: #{conv_forward.1} parent=1 // loop_footer_branch
      %12 = sbr.rel target = $region3
    $region8: #{conv_forward.1} parent=1 // loop_exit
      _
    %1195 = vsyncpa [#allocation3], 1
    %s1196 = scalar_lea.sflag [#allocation3], 1
    %1197 = vsyncpa %s1196, 1

</llo_original>
